<compile_context>
chip_gen: v7x
topology: tpu7x:2x2x1
jax: 0.10.0
libtpu: 0.0.40
codegen_flags: <defaults>
</compile_context>

<pallas_src>
import jax
import jax.numpy as jnp
from jax.experimental import pallas as pl
from jax.experimental.pallas import tpu as pltpu


def _round_up(x, m):
    return (x + m - 1) // m * m


# ---------------------------------------------------------------------------
# Pallas kernel: matmul + bias + ReLU + fused squash epilogue
# ---------------------------------------------------------------------------

def _conv_relu_squash_kernel(p_ref, w_ref, b_ref, s_ref, o_ref):
    # p_ref: (TM, KP)   bf16 im2col patches tile (zero in padded K columns / rows)
    # w_ref: (KP, OCP)  bf16 weights (zero in padded rows/cols)
    # b_ref: (1, OCP)   f32  bias (zero in padded cols)
    # s_ref: (OCP, OCP) bf16 same-capsule 0/1 indicator (zero rows/cols for padding)
    # o_ref: (TM, OCP)  bf16 squashed conv output tile
    acc = jnp.dot(p_ref[...], w_ref[...], preferred_element_type=jnp.float32)
    acc = jnp.maximum(acc + b_ref[...], 0.0)
    # Per-capsule squared norm broadcast to every lane of its capsule via one explicit
    # bf16 x bf16 MXU matmul (f32 accumulation).  S is exactly representable in bf16.
    sq = jnp.dot((acc * acc).astype(jnp.bfloat16), s_ref[...],
                 preferred_element_type=jnp.float32)
    # squash scale = sq / (1 + sq) / sqrt(sq + eps); recip + rsqrt go to the EUP slot
    # (free: kernel is DMA-bound).  Padded lanes have sq == 0 -> scale == 0 -> output 0.
    scale = sq * pl.reciprocal(1.0 + sq, approx=True) * jax.lax.rsqrt(sq + 1e-7)
    o_ref[...] = (scale * acc).astype(o_ref.dtype)


# ---------------------------------------------------------------------------
# Wrappers
# ---------------------------------------------------------------------------

def _im2col_bf16(x, k, kp):
    """x: (B, C, H, W) f32 -> (B, OH, OW, KP) bf16 im2col patches.

    Feature order is (kh, kw, c), matching the weight reshape below.  The K-dim zero
    padding (Kdim -> KP, lane-dense 128) is folded into the concat so the patches land
    in HBM already bf16 and 128-wide in one pass (no separate pad+astype round trip).
    """
    B, C, H, W = x.shape
    OH, OW = H - k + 1, W - k + 1
    xt = jnp.transpose(x, (0, 2, 3, 1)).astype(jnp.bfloat16)  # NHWC, cast once
    cols = [xt[:, dh:dh + OH, dw:dw + OW, :] for dh in range(k) for dw in range(k)]
    kdim = k * k * C
    if kp > kdim:
        cols.append(jnp.zeros((B, OH, OW, kp - kdim), jnp.bfloat16))
    return jnp.concatenate(cols, axis=-1)  # (B, OH, OW, KP)


def conv_relu_squash_pallas(patches2d, w2d, bias, caps1_dim, *, target_tm=1024):
    """patches2d: (M, KP) bf16 (KP a multiple of 128), w2d: (Kdim, OC) f32, bias: (OC,).

    Returns squashed conv output (M, OC) bf16; capsule groups are contiguous runs of
    `caps1_dim` along the OC axis.
    """
    M, KP = patches2d.shape
    Kdim, OC = w2d.shape
    D = caps1_dim
    OCP = _round_up(OC, 128)           # lane-dense output dim (keep 128, not 256)

    # M tile: as large as practical (mem-bound -> amortize the ~0.35us/step overhead and
    # hit the >=85%-of-roofline regime of 512+ row tiles), but keep >= 2 grid steps so
    # the "parallel" axis shards across v7x's two TensorCores.  Multiple of 16 (bf16).
    TM = max(16, min(target_tm, _round_up(pl.cdiv(M, 2), 16)))
    MP = _round_up(M, TM)
    if MP > M:
        patches2d = jnp.pad(patches2d, ((0, MP - M), (0, 0)))

    # weight / bias padded to lane-dense shapes (tiny, one-time).
    w_p = jnp.pad(w2d, ((0, KP - Kdim), (0, OCP - OC))).astype(jnp.bfloat16)
    bias_p = jnp.pad(bias, (0, OCP - OC)).reshape(1, OCP).astype(jnp.float32)

    # Same-capsule indicator S (bf16, exactly representable), zero rows/cols for padded
    # columns so padded lanes squash to exactly 0.
    oc_ids = jnp.arange(OCP)
    gid = jnp.where(oc_ids < OC, oc_ids // D, -1)
    same = ((gid[:, None] == gid[None, :]) & (gid[:, None] >= 0)).astype(jnp.bfloat16)

    out = pl.pallas_call(
        _conv_relu_squash_kernel,
        out_shape=jax.ShapeDtypeStruct((MP, OCP), jnp.bfloat16),
        grid_spec=pltpu.PrefetchScalarGridSpec(
            num_scalar_prefetch=0,
            grid=(MP // TM,),
            in_specs=[
                pl.BlockSpec((TM, KP), lambda i: (i, 0)),
                pl.BlockSpec((KP, OCP), lambda i: (0, 0)),
                pl.BlockSpec((1, OCP), lambda i: (0, 0)),
                pl.BlockSpec((OCP, OCP), lambda i: (0, 0)),
            ],
            out_specs=pl.BlockSpec((TM, OCP), lambda i: (i, 0)),
        ),
        compiler_params=pltpu.CompilerParams(
            dimension_semantics=("parallel",),
        ),
    )(patches2d, w_p, bias_p, same)
    return out[:M, :OC]


def primary_capsule_forward(x, weight, bias, caps1_num, caps1_dim, kernel_size):
    """Forward pass of PrimaryCapsule.

    x:      (B, C, H, W)  NCHW float32
    weight: (OC, C, K, K) float32 where OC = caps1_num * caps1_dim
    bias:   (OC,) float32
    returns (B, caps1_num * OH * OW, caps1_dim) float32
    """
    B, C, H, W = x.shape
    K = kernel_size
    OH, OW = H - K + 1, W - K + 1
    OC = caps1_num * caps1_dim
    Kdim = C * K * K
    KP = _round_up(Kdim, 128)

    # im2col (JAX glue), bf16 + lane-padded in a single pass.
    # TODO(synk): fold im2col into the kernel (stripe DMA from NHWC x with
    # memory_space=pl.ANY + K*K shifted-window matmuls) to remove the K*K HBM read
    # expansion at production sizes.
    patches = _im2col_bf16(x, K, KP)                          # (B, OH, OW, KP) bf16
    patches2d = patches.reshape(B * OH * OW, KP)

    # weight (OC, C, K, K) -> (Kdim, OC) with row order (kh, kw, c) matching patches.
    w2d = jnp.transpose(weight, (2, 3, 1, 0)).reshape(Kdim, OC)

    # Fused conv + bias + ReLU + squash (single Pallas hot path), bf16 output slab.
    conv = conv_relu_squash_pallas(patches2d, w2d, bias, caps1_dim)   # (M, OC) bf16

    # rearrange 'b (n d) h w -> b (n h w) d'.  Squash is per-capsule, so applying it
    # before this permutation is equivalent to the reference order.  Done on the bf16
    # slab (half the bytes), cast to f32 at the end.
    # TODO(synk): fold this permutation into the downstream routing/consumer kernel to
    # drop one full HBM pass over the activation.
    conv = conv.reshape(B, OH * OW, caps1_num, caps1_dim)
    conv = conv.transpose(0, 2, 1, 3)                         # (B, N, OH*OW, D)
    return conv.reshape(B, caps1_num * OH * OW, caps1_dim).astype(jnp.float32)


# ---------------------------------------------------------------------------
# Reference (pure JAX, f32) for sanity checking
# ---------------------------------------------------------------------------

def _reference_forward(x, weight, bias, caps1_num, caps1_dim, kernel_size):
    conv = jax.lax.conv_general_dilated(
        x, weight, window_strides=(1, 1), padding="VALID",
        dimension_numbers=("NCHW", "OIHW", "NCHW"))
    conv = conv + bias.reshape(1, -1, 1, 1)
    conv = jnp.maximum(conv, 0.0)
    B, _, OH, OW = conv.shape
    conv = conv.reshape(B, caps1_num, caps1_dim, OH, OW)
    conv = conv.transpose(0, 1, 3, 4, 2).reshape(B, caps1_num * OH * OW, caps1_dim)
    sq = jnp.sum(conv * conv, axis=-1, keepdims=True)
    v = sq / (1.0 + sq) / jnp.sqrt(sq + 1e-7)
    return v * conv


# ---------------------------------------------------------------------------
# Main
# ---------------------------------------------------------------------------

if __name__ == "__main__":
    # Small shapes consistent with the module's forward.
    B, C, H, W = 2, 4, 16, 16
    caps1_num, caps1_dim = 8, 8          # OC = 64
    kernel_size = 5                      # OH = OW = 12

    key = jax.random.PRNGKey(0)
    kx, kw, kb = jax.random.split(key, 3)

    x = jax.random.normal(kx, (B, C, H, W), dtype=jnp.float32)

    # Deterministic parameter init (synthetic, PyTorch-like uniform fan-in bound).
    OC = caps1_num * caps1_dim
    fan_in = C * kernel_size * kernel_size
    bound = 1.0 / jnp.sqrt(fan_in)
    weight = jax.random.uniform(kw, (OC, C, kernel_size, kernel_size),
                                dtype=jnp.float32, minval=-bound, maxval=bound)
    bias = jax.random.uniform(kb, (OC,), dtype=jnp.float32,
                              minval=-bound, maxval=bound)

    out = primary_capsule_forward(x, weight, bias, caps1_num, caps1_dim, kernel_size)
    out = jax.block_until_ready(out)

    ref = _reference_forward(x, weight, bias, caps1_num, caps1_dim, kernel_size)
    assert out.shape == (B, caps1_num * 12 * 12, caps1_dim)
    # Tolerance loosened for the bf16 MXU path, bf16 output slab and approx reciprocal
    # in the squash scale; the kernel is deliberately not bitwise-equal to f32.
    assert jnp.allclose(out, ref, atol=2e-2, rtol=2e-2), \
        f"max abs err {jnp.max(jnp.abs(out - ref))}"

    print("KERNEL_OK")
</pallas_src>

<mosaic_0001>
module attributes {stable_mosaic.version = 11 : i64} {
  func.func @_conv_relu_squash_kernel(%arg0: i32, %arg1: memref<144x128xbf16, #tpu.memory_space<vmem>>, %arg2: memref<128x128xbf16, #tpu.memory_space<vmem>>, %arg3: memref<1x128xf32, #tpu.memory_space<vmem>>, %arg4: memref<128x128xbf16, #tpu.memory_space<vmem>>, %arg5: memref<144x128xbf16, #tpu.memory_space<vmem>>) attributes {dimension_semantics = [#tpu.dimension_semantics<parallel>], iteration_bounds = array<i64: 2>, scalar_prefetch = 0 : i64, scratch_operands = 0 : i64, tpu.core_type = #tpu.core_type<tc>, window_params = [{transform_indices = @transform_0, window_bounds = array<i64: 144, 128>}, {pipeline_mode = #tpu.pipeline_mode<synchronous>, transform_indices = @transform_1, window_bounds = array<i64: 128, 128>}, {pipeline_mode = #tpu.pipeline_mode<synchronous>, transform_indices = @transform_2, window_bounds = array<i64: 1, 128>}, {pipeline_mode = #tpu.pipeline_mode<synchronous>, transform_indices = @transform_3, window_bounds = array<i64: 128, 128>}, {transform_indices = @transform_4, window_bounds = array<i64: 144, 128>}]} {
    %c0 = arith.constant 0 : index
    %c0_0 = arith.constant 0 : index
    %0 = vector.load %arg1[%c0, %c0_0] : memref<144x128xbf16, #tpu.memory_space<vmem>>, vector<144x128xbf16>
    %c0_1 = arith.constant 0 : index
    %c0_2 = arith.constant 0 : index
    %1 = vector.load %arg2[%c0_1, %c0_2] : memref<128x128xbf16, #tpu.memory_space<vmem>>, vector<128x128xbf16>
    %cst = arith.constant dense<0.000000e+00> : vector<144x128xf32>
    %2 = tpu.matmul %0, %1, %cst {dimension_numbers = #tpu.dot_dimension_numbers<[1], [0], [0], [1], [0, 0, 1, 1], [], []>} : vector<144x128xbf16>, vector<128x128xbf16>, vector<144x128xf32> -> vector<144x128xf32>
    %c0_3 = arith.constant 0 : index
    %c0_4 = arith.constant 0 : index
    %3 = vector.load %arg3[%c0_3, %c0_4] : memref<1x128xf32, #tpu.memory_space<vmem>>, vector<1x128xf32>
    %4 = vector.broadcast %3 : vector<1x128xf32> to vector<144x128xf32>
    %5 = arith.addf %2, %4 : vector<144x128xf32>
    %cst_5 = arith.constant 0.000000e+00 : f32
    %6 = vector.broadcast %cst_5 : f32 to vector<144x128xf32>
    %7 = arith.maximumf %5, %6 : vector<144x128xf32>
    %8 = arith.mulf %7, %7 : vector<144x128xf32>
    %9 = arith.truncf %8 : vector<144x128xf32> to vector<144x128xbf16>
    %c0_6 = arith.constant 0 : index
    %c0_7 = arith.constant 0 : index
    %10 = vector.load %arg4[%c0_6, %c0_7] : memref<128x128xbf16, #tpu.memory_space<vmem>>, vector<128x128xbf16>
    %cst_8 = arith.constant dense<0.000000e+00> : vector<144x128xf32>
    %11 = tpu.matmul %9, %10, %cst_8 {dimension_numbers = #tpu.dot_dimension_numbers<[1], [0], [0], [1], [0, 0, 1, 1], [], []>} : vector<144x128xbf16>, vector<128x128xbf16>, vector<144x128xf32> -> vector<144x128xf32>
    %cst_9 = arith.constant 1.000000e+00 : f32
    %12 = vector.broadcast %cst_9 : f32 to vector<144x128xf32>
    %13 = arith.addf %12, %11 : vector<144x128xf32>
    %14 = tpu.reciprocal %13 {approx = true} : vector<144x128xf32> -> vector<144x128xf32>
    %15 = arith.mulf %11, %14 : vector<144x128xf32>
    %cst_10 = arith.constant 1.000000e-07 : f32
    %16 = vector.broadcast %cst_10 : f32 to vector<144x128xf32>
    %17 = arith.addf %11, %16 : vector<144x128xf32>
    %18 = math.rsqrt %17 : vector<144x128xf32>
    %19 = arith.mulf %15, %18 : vector<144x128xf32>
    %20 = arith.mulf %19, %7 : vector<144x128xf32>
    %21 = arith.truncf %20 : vector<144x128xf32> to vector<144x128xbf16>
    %c0_11 = arith.constant 0 : index
    %c0_12 = arith.constant 0 : index
    %22 = vector.load %arg5[%c0_11, %c0_12] : memref<144x128xbf16, #tpu.memory_space<vmem>>, vector<144x128xbf16>
    tpu.vector_store %arg5[%c0_11, %c0_12], %21 {strides = array<i32>} : memref<144x128xbf16, #tpu.memory_space<vmem>>, vector<144x128xbf16>,
    return
  }
  func.func @transform_0(%arg0: i32) -> (i32, i32) {
    %c0_i32 = arith.constant 0 : i32
    %c0_i32_0 = arith.constant 0 : i32
    return %arg0, %c0_i32 : i32, i32
  }
  func.func @transform_1(%arg0: i32) -> (i32, i32) {
    %c0_i32 = arith.constant 0 : i32
    %c0_i32_0 = arith.constant 0 : i32
    %c0_i32_1 = arith.constant 0 : i32
    return %c0_i32, %c0_i32_0 : i32, i32
  }
  func.func @transform_2(%arg0: i32) -> (i32, i32) {
    %c0_i32 = arith.constant 0 : i32
    %c0_i32_0 = arith.constant 0 : i32
    %c0_i32_1 = arith.constant 0 : i32
    return %c0_i32, %c0_i32_0 : i32, i32
  }
  func.func @transform_3(%arg0: i32) -> (i32, i32) {
    %c0_i32 = arith.constant 0 : i32
    %c0_i32_0 = arith.constant 0 : i32
    %c0_i32_1 = arith.constant 0 : i32
    return %c0_i32, %c0_i32_0 : i32, i32
  }
  func.func @transform_4(%arg0: i32) -> (i32, i32) {
    %c0_i32 = arith.constant 0 : i32
    %c0_i32_0 = arith.constant 0 : i32
    return %arg0, %c0_i32 : i32, i32
  }
}

</mosaic_0001>

<llo_original>
// kernel: tpu_custom_call.1
$region0: #{tpu_custom_call.1}
  #allocation0 [shape = 'u32[]', space=smem, size = 0x4, offset = 0x4, fixed_abs, tag = 'smem constant byte address 0x4 - core index']
  #allocation1 [shape = 'u32[144,128]{1,0:T(1,128)}', space=vmem, size = 0x12000, scoped, tag = 'internal scratch']
  %s0 = inlined_call_operand.hbm [shape: bf16[288,128], index: 0, kind: input, shape index: {}]
  %s1 = inlined_call_operand.hbm [shape: bf16[128,128], index: 1, kind: input, shape index: {}]
  %s2 = inlined_call_operand.vmem [shape: f32[1,128], index: 2, kind: input, shape index: {}]
  %s3 = inlined_call_operand.hbm [shape: bf16[128,128], index: 3, kind: input, shape index: {}]
  %s4 = inlined_call_operand.hbm [shape: bf16[288,128], index: 4, kind: output, shape index: {}]
  %s5 = sld [smem:[#allocation0]]
  $region61: #{tpu_custom_call.1} parent=0
    _
  %s7 = ssub.s32 1, %s5
  %s8 = scalar_select 0, %s7, %s5
  $region1: #{tpu_custom_call.1} parent=0
    #allocation2 [shape = 'u8[73728]{0}', space=vmem, size = 0x12000, scoped, tag = 'input window, operand 0']
    #allocation3 [shape = 's32[2]{0}', space=sflag, size = 0x8, scoped, tag = 'scoped memory for tpu_custom_call.1']
    #allocation4 [shape = 's32[2]{0}', space=sflag, size = 0x8, scoped, tag = 'scoped memory for tpu_custom_call.1']
    #allocation5 [shape = 'u8[32768]{0}', space=vmem, size = 0x8000, scoped, tag = 'input window, operand 1, single buffered']
    #allocation6 [shape = 's32[1]{0}', space=sflag, size = 0x4, scoped, tag = 'scoped memory for tpu_custom_call.1']
    #allocation7 [shape = 'u8[32768]{0}', space=vmem, size = 0x8000, scoped, tag = 'input window, operand 3, single buffered']
    #allocation8 [shape = 'u8[73728]{0}', space=vmem, size = 0x12000, scoped, tag = 'output window, operand 0']
    %9 = vsyncpa [#allocation3], 0
    %s10 = scalar_lea.sflag [#allocation3], 1
    %11 = vsyncpa %s10, 0
    %12 = vsyncpa [#allocation6], 0
    %13 = vsyncpa [#allocation4], 0
    %s14 = scalar_lea.sflag [#allocation4], 1
    %15 = vsyncpa %s14, 0
    loop: start=0, step=1, limit=4
    $region2: #{tpu_custom_call.1} parent=1 // loop_pre_header
      _
    $region3: #{tpu_custom_call.1} parent=1 // loop_header
      %s17 = sphi 0, %s21
      %p18 = scmp.ge.s32.totalorder %s17, 4
      %s27 = sphi 0, %s29
      %s30 = sphi 0, %s27
      %s31 = sphi 0, %s30
      %s47 = sphi 0, %s31
      %s51 = sphi 0, %s51
      %s53 = sphi 0, %s51
      %s54 = sphi 0, %s53
      %s68 = sphi 0, %s54
      %s72 = sphi 0, %s72
      %s74 = sphi 0, %s72
      %s75 = sphi 0, %s74
      %s89 = sphi 0, %s75
      %s93 = sphi 0, %s93
      %s95 = sphi 0, %s93
      %s96 = sphi 0, %s95
      %s110 = sphi 0, %s96
      %s116 = sphi 0, %s118
      %s119 = sphi 0, %s116
      %s120 = sphi 0, %s119
      %s136 = sphi 0, %s120
    $region4: #{tpu_custom_call.1} parent=1 // loop_header_branch
      %20 = sbr.rel (%p18) target = $region8
    $region5: #{tpu_custom_call.1} parent=1 // loop_body
      %s22 = ssub.s32 %s17, 1
      %s23 = ssub.s32 %s17, 2
      %s24 = sadd.s32 %s17, 1
      %s25 = ssub.s32 %s17, %s24
      %p26 = scmp.eq.s32.totalorder %s25, 0
      %s28 = sadd.s32 %s27, 1
      %s29 = scalar_select %p26, %s27, %s28
      %p32 = pneg %p26
      %p33 = scmp.eq.s32.totalorder %s17, 1
      %p34 = por %p32, %p33
      %p35 = scmp.ne.s32.totalorder %s27, %s30
      %p36 = scmp.eq.s32.totalorder %s17, 0
      %p37 = por %p35, %p36
      %p38 = scmp.ne.s32.totalorder %s27, %s30
      %p39 = scmp.eq.s32.totalorder %s22, 1
      %p40 = por %p38, %p39
      %p41 = scmp.ne.s32.totalorder %s30, %s31
      %p42 = scmp.eq.s32.totalorder %s22, 0
      %p43 = por %p41, %p42
      %p44 = scmp.ne.s32.totalorder %s30, %s31
      %p45 = scmp.eq.s32.totalorder %s23, 1
      %p46 = por %p44, %p45
      %p48 = scmp.ne.s32.totalorder %s31, %s47
      %p49 = scmp.eq.s32.totalorder %s23, 0
      %p50 = por %p48, %p49
      %s52 = sadd.s32 %s51, 1
      %p55 = scmp.eq.s32.totalorder %s17, 1
      %p56 = scmp.ne.s32.totalorder %s51, %s53
      %p57 = scmp.eq.s32.totalorder %s17, 0
      %p58 = por %p56, %p57
      %p59 = scmp.ne.s32.totalorder %s51, %s53
      %p60 = scmp.eq.s32.totalorder %s22, 1
      %p61 = por %p59, %p60
      %p62 = scmp.ne.s32.totalorder %s53, %s54
      %p63 = scmp.eq.s32.totalorder %s22, 0
      %p64 = por %p62, %p63
      %p65 = scmp.ne.s32.totalorder %s53, %s54
      %p66 = scmp.eq.s32.totalorder %s23, 1
      %p67 = por %p65, %p66
      %p69 = scmp.ne.s32.totalorder %s54, %s68
      %p70 = scmp.eq.s32.totalorder %s23, 0
      %p71 = por %p69, %p70
      %s73 = sadd.s32 %s72, 1
      %p76 = scmp.eq.s32.totalorder %s17, 1
      %p77 = scmp.ne.s32.totalorder %s72, %s74
      %p78 = scmp.eq.s32.totalorder %s17, 0
      %p79 = por %p77, %p78
      %p80 = scmp.ne.s32.totalorder %s72, %s74
      %p81 = scmp.eq.s32.totalorder %s22, 1
      %p82 = por %p80, %p81
      %p83 = scmp.ne.s32.totalorder %s74, %s75
      %p84 = scmp.eq.s32.totalorder %s22, 0
      %p85 = por %p83, %p84
      %p86 = scmp.ne.s32.totalorder %s74, %s75
      %p87 = scmp.eq.s32.totalorder %s23, 1
      %p88 = por %p86, %p87
      %p90 = scmp.ne.s32.totalorder %s75, %s89
      %p91 = scmp.eq.s32.totalorder %s23, 0
      %p92 = por %p90, %p91
      %s94 = sadd.s32 %s93, 1
      %p97 = scmp.eq.s32.totalorder %s17, 1
      %p98 = scmp.ne.s32.totalorder %s93, %s95
      %p99 = scmp.eq.s32.totalorder %s17, 0
      %p100 = por %p98, %p99
      %p101 = scmp.ne.s32.totalorder %s93, %s95
      %p102 = scmp.eq.s32.totalorder %s22, 1
      %p103 = por %p101, %p102
      %p104 = scmp.ne.s32.totalorder %s95, %s96
      %p105 = scmp.eq.s32.totalorder %s22, 0
      %p106 = por %p104, %p105
      %p107 = scmp.ne.s32.totalorder %s95, %s96
      %p108 = scmp.eq.s32.totalorder %s23, 1
      %p109 = por %p107, %p108
      %p111 = scmp.ne.s32.totalorder %s96, %s110
      %p112 = scmp.eq.s32.totalorder %s23, 0
      %p113 = por %p111, %p112
      %s114 = ssub.s32 %s17, %s24
      %p115 = scmp.eq.s32.totalorder %s114, 0
      %s117 = sadd.s32 %s116, 1
      %s118 = scalar_select %p115, %s116, %s117
      %p121 = pneg %p115
      %p122 = scmp.eq.s32.totalorder %s17, 1
      %p123 = por %p121, %p122
      %p124 = scmp.ne.s32.totalorder %s116, %s119
      %p125 = scmp.eq.s32.totalorder %s17, 0
      %p126 = por %p124, %p125
      %p127 = scmp.ne.s32.totalorder %s116, %s119
      %p128 = scmp.eq.s32.totalorder %s22, 1
      %p129 = por %p127, %p128
      %p130 = scmp.ne.s32.totalorder %s119, %s120
      %p131 = scmp.eq.s32.totalorder %s22, 0
      %p132 = por %p130, %p131
      %p133 = scmp.ne.s32.totalorder %s119, %s120
      %p134 = scmp.eq.s32.totalorder %s23, 1
      %p135 = por %p133, %p134
      %p137 = scmp.ne.s32.totalorder %s120, %s136
      %p138 = scmp.eq.s32.totalorder %s23, 0
      %p139 = por %p137, %p138
      %p140 = scmp.le.s32.totalorder 1, %s17
      %p141 = scmp.lt.s32.totalorder %s17, 3
      %p142 = pnand %p140, %p141
      %p143 = pneg %p142
      // Predicated region
      $region9: #{tpu_custom_call.1} parent=5 // pred_check
        _
      $region10: #{tpu_custom_call.1} parent=5 // pred_check_branch
        %145 = sbr.rel (%p142) target = $region12
      $region11: #{tpu_custom_call.1} parent=5 // pred_region
        %s146 = ssub.s32 %s17, 1
        // Predicated region
        $region13: #{tpu_custom_call.1} parent=11 // pred_check
          %p147 = pneg %p64
        $region14: #{tpu_custom_call.1} parent=11 // pred_check_branch
          %149 = sbr.rel (%p147) target = $region16
        $region15: #{tpu_custom_call.1} parent=11 // pred_region
          %s151 = ssub.s32 1024, 1024
          %152 = vsyncadd [#allocation6], %s151
          %s153 = sshll.u32 [#allocation5], 4
          %s154 = int_to_ptr.vmem [resolvable:$true] %s153
          %159 = dma.hbm_to_vmem [thread:$0]  %s1, 1024, %s154, [#allocation6], 64, 64, 4
        $region16: #{tpu_custom_call.1} parent=11 // pred_fallthru
          _
        // Predicated region
        $region17: #{tpu_custom_call.1} parent=11 // pred_check
          %p160 = pneg %p85
        $region18: #{tpu_custom_call.1} parent=11 // pred_check_branch
          %162 = sbr.rel (%p160) target = $region20
        $region19: #{tpu_custom_call.1} parent=11 // pred_region
          _
        $region20: #{tpu_custom_call.1} parent=11 // pred_fallthru
          _
        // Predicated region
        $region21: #{tpu_custom_call.1} parent=11 // pred_check
          %p163 = pneg %p106
        $region22: #{tpu_custom_call.1} parent=11 // pred_check_branch
          %165 = sbr.rel (%p163) target = $region24
        $region23: #{tpu_custom_call.1} parent=11 // pred_region
          %s167 = ssub.s32 1024, 1024
          %168 = vsyncadd [#allocation6], %s167
          %s169 = sshll.u32 [#allocation7], 4
          %s170 = int_to_ptr.vmem [resolvable:$true] %s169
          %175 = dma.hbm_to_vmem [thread:$0]  %s3, 1024, %s170, [#allocation6], 64, 64, 4
        $region24: #{tpu_custom_call.1} parent=11 // pred_fallthru
          _
      $region12: #{tpu_custom_call.1} parent=5 // pred_fallthru
        _
      %p176 = scmp.lt.s32.totalorder %s17, 2
      // Predicated region
      $region25: #{tpu_custom_call.1} parent=5 // pred_check
        %p177 = pneg %p176
      $region26: #{tpu_custom_call.1} parent=5 // pred_check_branch
        %179 = sbr.rel (%p177) target = $region28
      $region27: #{tpu_custom_call.1} parent=5 // pred_region
        // Predicated region
        $region29: #{tpu_custom_call.1} parent=27 // pred_check
          %p180 = pneg %p37
        $region30: #{tpu_custom_call.1} parent=27 // pred_check_branch
          %182 = sbr.rel (%p180) target = $region32
        $region31: #{tpu_custom_call.1} parent=27 // pred_region
          %s183 = sand.u32 %s27, 1
          %s184 = scalar_lea.sflag [#allocation3], %s183
          %s185 = sand.u32 %s27, 1
          %s186 = smul.addr %s185, 72
          %s187 = scalar_lea.vmem [#allocation2], %s186
          %s188 = smul.u32 18, %s17
          %s190 = ssub.s32 1152, 1152
          %191 = vsyncadd %s184, %s190
          %s192 = smul.addr %s188, 64
          %s193 = scalar_lea.hbm %s0, %s192
          %s194 = sshll.u32 %s187, 4
          %s195 = int_to_ptr.vmem [resolvable:$true] %s194
          %200 = dma.hbm_to_vmem [thread:$0]  %s193, 1152, %s195, %s184, 64, 64, 4
        $region32: #{tpu_custom_call.1} parent=27 // pred_fallthru
          _
      $region28: #{tpu_custom_call.1} parent=5 // pred_fallthru
        _
      %p201 = scmp.le.s32.totalorder 1, %s17
      %p202 = scmp.lt.s32.totalorder %s17, 3
      %p203 = pnand %p201, %p202
      %p204 = pneg %p203
      // Predicated region
      $region33: #{tpu_custom_call.1} parent=5 // pred_check
        _
      $region34: #{tpu_custom_call.1} parent=5 // pred_check_branch
        %206 = sbr.rel (%p203) target = $region36
      $region35: #{tpu_custom_call.1} parent=5 // pred_region
        %s207 = ssub.s32 %s17, 1
        %s208 = sand.u32 %s30, 1
        %s209 = scalar_lea.sflag [#allocation3], %s208
        %s210 = sand.u32 %s30, 1
        %s211 = smul.addr %s210, 72
        %s212 = scalar_lea.vmem [#allocation2], %s211
        // Predicated region
        $region37: #{tpu_custom_call.1} parent=35 // pred_check
          %p213 = pneg %p43
        $region38: #{tpu_custom_call.1} parent=35 // pred_check_branch
          %215 = sbr.rel (%p213) target = $region40
        $region39: #{tpu_custom_call.1} parent=35 // pred_region
          %216 = dma.done %s209, 1152
        $region40: #{tpu_custom_call.1} parent=35 // pred_fallthru
          _
        // Predicated region
        $region41: #{tpu_custom_call.1} parent=35 // pred_check
          %p217 = pneg %p64
        $region42: #{tpu_custom_call.1} parent=35 // pred_check_branch
          %219 = sbr.rel (%p217) target = $region44
        $region43: #{tpu_custom_call.1} parent=35 // pred_region
          %220 = dma.done [#allocation6], 1024
        $region44: #{tpu_custom_call.1} parent=35 // pred_fallthru
          _
        // Predicated region
        $region45: #{tpu_custom_call.1} parent=35 // pred_check
          %p221 = pneg %p106
        $region46: #{tpu_custom_call.1} parent=35 // pred_check_branch
          %223 = sbr.rel (%p221) target = $region48
        $region47: #{tpu_custom_call.1} parent=35 // pred_region
          %224 = dma.done [#allocation6], 1024
        $region48: #{tpu_custom_call.1} parent=35 // pred_fallthru
          _
        %s225 = sand.u32 %s30, 1
        %s226 = scalar_lea.sflag [#allocation3], %s225
        %s227 = sand.u32 %s30, 1
        %s228 = smul.addr %s227, 72
        %s229 = scalar_lea.vmem [#allocation2], %s228
        %p230 = pneg %p43
        %p231 = pneg %p40
        %p232 = pneg %p64
        %p233 = pneg %p61
        %p234 = pneg %p85
        %p235 = pneg %p82
        %p236 = pneg %p106
        %p237 = pneg %p103
        %p238 = pneg %p132
        %p239 = pneg %p129
        %s240 = sand.u32 %s119, 1
        %s241 = scalar_lea.sflag [#allocation4], %s240
        %s242 = sand.u32 %s119, 1
        %s243 = smul.addr %s242, 72
        %s244 = scalar_lea.vmem [#allocation8], %s243
        %s245 = smul.u32 18, %s22
        %s246 = smul.u32 18, %s22
        %v248 = vld [vmem:[%s212] sm:$0xf]
        %v249 = vld [vmem:[%s212 + $0x4] sm:$0xf]
        %v250 = vld [vmem:[%s212 + $0x8] sm:$0xf]
        %v251 = vld [vmem:[%s212 + $0xc] sm:$0xf]
        %v252 = vld [vmem:[%s212 + $0x10] sm:$0xf]
        %v253 = vld [vmem:[%s212 + $0x14] sm:$0xf]
        %v254 = vld [vmem:[%s212 + $0x18] sm:$0xf]
        %v255 = vld [vmem:[%s212 + $0x1c] sm:$0xf]
        %v256 = vld [vmem:[%s212 + $0x20] sm:$0xf]
        %v257 = vld [vmem:[%s212 + $0x24] sm:$0xf]
        %v258 = vld [vmem:[%s212 + $0x28] sm:$0xf]
        %v259 = vld [vmem:[%s212 + $0x2c] sm:$0xf]
        %v260 = vld [vmem:[%s212 + $0x30] sm:$0xf]
        %v261 = vld [vmem:[%s212 + $0x34] sm:$0xf]
        %v262 = vld [vmem:[%s212 + $0x38] sm:$0xf]
        %v263 = vld [vmem:[%s212 + $0x3c] sm:$0xf]
        %v264 = vld [vmem:[%s212 + $0x40] sm:$0xf]
        %v265 = vld [vmem:[%s212 + $0x44] sm:$0xf]
        %v266 = vld [vmem:[#allocation5] sm:$0xf]
        %v267 = vld [vmem:[#allocation5 + $0x4] sm:$0xf]
        %v268 = vld [vmem:[#allocation5 + $0x8] sm:$0xf]
        %v269 = vld [vmem:[#allocation5 + $0xc] sm:$0xf]
        %v270 = vld [vmem:[#allocation5 + $0x10] sm:$0xf]
        %v271 = vld [vmem:[#allocation5 + $0x14] sm:$0xf]
        %v272 = vld [vmem:[#allocation5 + $0x18] sm:$0xf]
        %v273 = vld [vmem:[#allocation5 + $0x1c] sm:$0xf]
        %v274 = vld [vmem:[#allocation5 + $0x20] sm:$0xf]
        %v275 = vld [vmem:[#allocation5 + $0x24] sm:$0xf]
        %v276 = vld [vmem:[#allocation5 + $0x28] sm:$0xf]
        %v277 = vld [vmem:[#allocation5 + $0x2c] sm:$0xf]
        %v278 = vld [vmem:[#allocation5 + $0x30] sm:$0xf]
        %v279 = vld [vmem:[#allocation5 + $0x34] sm:$0xf]
        %v280 = vld [vmem:[#allocation5 + $0x38] sm:$0xf]
        %v281 = vld [vmem:[#allocation5 + $0x3c] sm:$0xf]
        %v282 = vld [vmem:[%s2] sm:$0x1]
        %v284 = vlaneseq
        %v285 = vshrl.u32 %v284, 7
        %v286 = vsub.s32 0, %v285
        %v287 = vrot.slane %v282, %v286
        %v307 = vunpack.c.l.b16 %v248
        %v308 = vunpack.c.l.b16 %v249
        %v309 = vunpack.c.l.b16 %v250
        %v310 = vunpack.c.l.b16 %v251
        %v311 = vunpack.c.l.b16 %v252
        %v312 = vunpack.c.l.b16 %v253
        %v313 = vunpack.c.l.b16 %v254
        %v314 = vunpack.c.l.b16 %v255
        %v315 = vunpack.c.l.b16 %v256
        %v316 = vunpack.c.l.b16 %v257
        %v317 = vunpack.c.l.b16 %v258
        %v318 = vunpack.c.l.b16 %v259
        %v319 = vunpack.c.l.b16 %v260
        %v320 = vunpack.c.l.b16 %v261
        %v321 = vunpack.c.l.b16 %v262
        %v322 = vunpack.c.l.b16 %v263
        %v323 = vunpack.c.l.b16 %v264
        %v324 = vunpack.c.l.b16 %v265
        %v325 = vpack.c.b16 %v308, %v307
        %v326 = vpack.c.b16 %v310, %v309
        %v327 = vpack.c.b16 %v312, %v311
        %v328 = vpack.c.b16 %v314, %v313
        %v329 = vpack.c.b16 %v316, %v315
        %v330 = vpack.c.b16 %v318, %v317
        %v331 = vpack.c.b16 %v320, %v319
        %v332 = vpack.c.b16 %v322, %v321
        %v333 = vpack.c.b16 %v324, %v323
        %v359 = vunpack.c.l.b16 %v266
        %v360 = vunpack.c.l.b16 %v267
        %v361 = vunpack.c.l.b16 %v268
        %v362 = vunpack.c.l.b16 %v269
        %v363 = vunpack.c.l.b16 %v270
        %v364 = vunpack.c.l.b16 %v271
        %v365 = vunpack.c.l.b16 %v272
        %v366 = vunpack.c.l.b16 %v273
        %v367 = vunpack.c.l.b16 %v274
        %v368 = vunpack.c.l.b16 %v275
        %v369 = vunpack.c.l.b16 %v276
        %v370 = vunpack.c.l.b16 %v277
        %v371 = vunpack.c.l.b16 %v278
        %v372 = vunpack.c.l.b16 %v279
        %v373 = vunpack.c.l.b16 %v280
        %v374 = vunpack.c.l.b16 %v281
        %v375 = vpack.c.b16 %v360, %v359
        %v376 = vpack.c.b16 %v362, %v361
        %v377 = vpack.c.b16 %v364, %v363
        %v378 = vpack.c.b16 %v366, %v365
        %v379 = vpack.c.b16 %v368, %v367
        %v380 = vpack.c.b16 %v370, %v369
        %v381 = vpack.c.b16 %v372, %v371
        %v382 = vpack.c.b16 %v374, %v373
        %391 = vmatprep.subr.bf16.mxu0 0
        %392 = vmatpush1.bf16.msra.mxu0 %v375
        %393 = vmatprep.subr.bf16.mxu0 0
        %394 = vmatpush1.bf16.msra.mxu0 %v376
        %395 = vmatprep.subr.bf16.mxu0 0
        %396 = vmatpush1.bf16.msra.mxu0 %v377
        %397 = vmatprep.subr.bf16.mxu0 0
        %398 = vmatpush1.bf16.msra.mxu0 %v378
        %399 = vmatprep.subr.bf16.mxu0 0
        %400 = vmatpush1.bf16.msra.mxu0 %v379
        %401 = vmatprep.subr.bf16.mxu0 0
        %402 = vmatpush1.bf16.msra.mxu0 %v380
        %403 = vmatprep.subr.bf16.mxu0 0
        %404 = vmatpush1.bf16.msra.mxu0 %v381
        %405 = vmatprep.subr.bf16.mxu0 0
        %406 = vmatpush1.bf16.msra.mxu0 %v382
        %407 = vmatprep.subr.bf16.mxu0 0
        %408 = vmatpush1.bf16.msra.mxu0 0
        %409 = vmatprep.subr.bf16.mxu0 0
        %410 = vmatpush1.bf16.msra.mxu0 0
        %411 = vmatprep.subr.bf16.mxu0 0
        %412 = vmatpush1.bf16.msra.mxu0 0
        %413 = vmatprep.subr.bf16.mxu0 0
        %414 = vmatpush1.bf16.msra.mxu0 0
        %415 = vmatprep.subr.bf16.mxu0 0
        %416 = vmatpush1.bf16.msra.mxu0 0
        %417 = vmatprep.subr.bf16.mxu0 0
        %418 = vmatpush1.bf16.msra.mxu0 0
        %419 = vmatprep.subr.bf16.mxu0 0
        %420 = vmatpush1.bf16.msra.mxu0 0
        %421 = vmatprep.subr.bf16.mxu0 0
        %422 = vmatpush1.bf16.msra.mxu0 0
        %423 = vmatprep.mubr.bf16.mxu0 0
        %424 = vmatmul.mubr.bf16.gmra.mrb[0].mxu0 %v325
        %v425 = vpop.f32.mrb[0].mxu0
        %v426 = vadd.f32 %v287, %v425
        %v427 = vpop.f32.mrb[0].mxu0
        %v428 = vpop.f32.mrb[0].mxu0
        %v429 = vadd.f32 %v287, %v428
        %v430 = vpop.f32.mrb[0].mxu0
        %431 = vmatprep.mubr.bf16.mxu0 0
        %432 = vmatmul.mubr.bf16.gmra.mrb[0].mxu0 %v326
        %v433 = vpop.f32.mrb[0].mxu0
        %v434 = vadd.f32 %v287, %v433
        %v435 = vpop.f32.mrb[0].mxu0
        %v436 = vpop.f32.mrb[0].mxu0
        %v437 = vadd.f32 %v287, %v436
        %v438 = vpop.f32.mrb[0].mxu0
        %439 = vmatprep.mubr.bf16.mxu0 0
        %440 = vmatmul.mubr.bf16.gmra.mrb[0].mxu0 %v327
        %v441 = vpop.f32.mrb[0].mxu0
        %v442 = vadd.f32 %v287, %v441
        %v443 = vpop.f32.mrb[0].mxu0
        %v444 = vpop.f32.mrb[0].mxu0
        %v445 = vadd.f32 %v287, %v444
        %v446 = vpop.f32.mrb[0].mxu0
        %447 = vmatprep.mubr.bf16.mxu0 0
        %448 = vmatmul.mubr.bf16.gmra.mrb[0].mxu0 %v328
        %v449 = vpop.f32.mrb[0].mxu0
        %v450 = vadd.f32 %v287, %v449
        %v451 = vpop.f32.mrb[0].mxu0
        %v452 = vpop.f32.mrb[0].mxu0
        %v453 = vadd.f32 %v287, %v452
        %v454 = vpop.f32.mrb[0].mxu0
        %455 = vmatprep.mubr.bf16.mxu0 0
        %456 = vmatmul.mubr.bf16.gmra.mrb[0].mxu0 %v329
        %v457 = vpop.f32.mrb[0].mxu0
        %v458 = vadd.f32 %v287, %v457
        %v459 = vpop.f32.mrb[0].mxu0
        %v460 = vpop.f32.mrb[0].mxu0
        %v461 = vadd.f32 %v287, %v460
        %v462 = vpop.f32.mrb[0].mxu0
        %463 = vmatprep.mubr.bf16.mxu0 0
        %464 = vmatmul.mubr.bf16.gmra.mrb[0].mxu0 %v330
        %v465 = vpop.f32.mrb[0].mxu0
        %v466 = vadd.f32 %v287, %v465
        %v467 = vpop.f32.mrb[0].mxu0
        %v468 = vpop.f32.mrb[0].mxu0
        %v469 = vadd.f32 %v287, %v468
        %v470 = vpop.f32.mrb[0].mxu0
        %471 = vmatprep.mubr.bf16.mxu0 0
        %472 = vmatmul.mubr.bf16.gmra.mrb[0].mxu0 %v331
        %v473 = vpop.f32.mrb[0].mxu0
        %v474 = vadd.f32 %v287, %v473
        %v475 = vpop.f32.mrb[0].mxu0
        %v476 = vpop.f32.mrb[0].mxu0
        %v477 = vadd.f32 %v287, %v476
        %v478 = vpop.f32.mrb[0].mxu0
        %479 = vmatprep.mubr.bf16.mxu0 0
        %480 = vmatmul.mubr.bf16.gmra.mrb[0].mxu0 %v332
        %v481 = vpop.f32.mrb[0].mxu0
        %v482 = vadd.f32 %v287, %v481
        %v483 = vpop.f32.mrb[0].mxu0
        %v484 = vpop.f32.mrb[0].mxu0
        %v485 = vadd.f32 %v287, %v484
        %v486 = vpop.f32.mrb[0].mxu0
        %487 = vmatprep.mubr.bf16.mxu0 0
        %488 = vmatmul.mubr.bf16.gmra.mrb[0].mxu0 %v333
        %v489 = vpop.f32.mrb[0].mxu0
        %v490 = vadd.f32 %v287, %v489
        %v491 = vpop.f32.mrb[0].mxu0
        %v492 = vpop.f32.mrb[0].mxu0
        %v493 = vadd.f32 %v287, %v492
        %v494 = vpop.f32.mrb[0].mxu0
        %495 = vdwg.mxu0
        %v496 = vmax.f32 %v426, 0.0
        %v497 = vmax.f32 %v429, 0.0
        %v498 = vmax.f32 %v434, 0.0
        %v499 = vmax.f32 %v437, 0.0
        %v500 = vmax.f32 %v442, 0.0
        %v501 = vmax.f32 %v445, 0.0
        %v502 = vmax.f32 %v450, 0.0
        %v503 = vmax.f32 %v453, 0.0
        %v504 = vmax.f32 %v458, 0.0
        %v505 = vmax.f32 %v461, 0.0
        %v506 = vmax.f32 %v466, 0.0
        %v507 = vmax.f32 %v469, 0.0
        %v508 = vmax.f32 %v474, 0.0
        %v509 = vmax.f32 %v477, 0.0
        %v510 = vmax.f32 %v482, 0.0
        %v511 = vmax.f32 %v485, 0.0
        %v512 = vmax.f32 %v490, 0.0
        %v513 = vmax.f32 %v493, 0.0
        %v514 = vmul.f32 %v496, %v496
        %v515 = vmul.f32 %v497, %v497
        %v516 = vmul.f32 %v498, %v498
        %v517 = vmul.f32 %v499, %v499
        %v518 = vmul.f32 %v500, %v500
        %v519 = vmul.f32 %v501, %v501
        %v520 = vmul.f32 %v502, %v502
        %v521 = vmul.f32 %v503, %v503
        %v522 = vmul.f32 %v504, %v504
        %v523 = vmul.f32 %v505, %v505
        %v524 = vmul.f32 %v506, %v506
        %v525 = vmul.f32 %v507, %v507
        %v526 = vmul.f32 %v508, %v508
        %v527 = vmul.f32 %v509, %v509
        %v528 = vmul.f32 %v510, %v510
        %v529 = vmul.f32 %v511, %v511
        %v530 = vmul.f32 %v512, %v512
        %v531 = vmul.f32 %v513, %v513
        %v532 = vpack.c.bf16 %v515, %v514
        %v533 = vpack.c.bf16 %v517, %v516
        %v534 = vpack.c.bf16 %v519, %v518
        %v535 = vpack.c.bf16 %v521, %v520
        %v536 = vpack.c.bf16 %v523, %v522
        %v537 = vpack.c.bf16 %v525, %v524
        %v538 = vpack.c.bf16 %v527, %v526
        %v539 = vpack.c.bf16 %v529, %v528
        %v540 = vpack.c.bf16 %v531, %v530
        %v541 = vld [vmem:[#allocation7] sm:$0xf]
        %v542 = vld [vmem:[#allocation7 + $0x4] sm:$0xf]
        %v543 = vld [vmem:[#allocation7 + $0x8] sm:$0xf]
        %v544 = vld [vmem:[#allocation7 + $0xc] sm:$0xf]
        %v545 = vld [vmem:[#allocation7 + $0x10] sm:$0xf]
        %v546 = vld [vmem:[#allocation7 + $0x14] sm:$0xf]
        %v547 = vld [vmem:[#allocation7 + $0x18] sm:$0xf]
        %v548 = vld [vmem:[#allocation7 + $0x1c] sm:$0xf]
        %v549 = vld [vmem:[#allocation7 + $0x20] sm:$0xf]
        %v550 = vld [vmem:[#allocation7 + $0x24] sm:$0xf]
        %v551 = vld [vmem:[#allocation7 + $0x28] sm:$0xf]
        %v552 = vld [vmem:[#allocation7 + $0x2c] sm:$0xf]
        %v553 = vld [vmem:[#allocation7 + $0x30] sm:$0xf]
        %v554 = vld [vmem:[#allocation7 + $0x34] sm:$0xf]
        %v555 = vld [vmem:[#allocation7 + $0x38] sm:$0xf]
        %v556 = vld [vmem:[#allocation7 + $0x3c] sm:$0xf]
        %v573 = vunpack.c.l.b16 %v541
        %v574 = vunpack.c.l.b16 %v542
        %v575 = vunpack.c.l.b16 %v543
        %v576 = vunpack.c.l.b16 %v544
        %v577 = vunpack.c.l.b16 %v545
        %v578 = vunpack.c.l.b16 %v546
        %v579 = vunpack.c.l.b16 %v547
        %v580 = vunpack.c.l.b16 %v548
        %v581 = vunpack.c.l.b16 %v549
        %v582 = vunpack.c.l.b16 %v550
        %v583 = vunpack.c.l.b16 %v551
        %v584 = vunpack.c.l.b16 %v552
        %v585 = vunpack.c.l.b16 %v553
        %v586 = vunpack.c.l.b16 %v554
        %v587 = vunpack.c.l.b16 %v555
        %v588 = vunpack.c.l.b16 %v556
        %v589 = vpack.c.b16 %v574, %v573
        %v590 = vpack.c.b16 %v576, %v575
        %v591 = vpack.c.b16 %v578, %v577
        %v592 = vpack.c.b16 %v580, %v579
        %v593 = vpack.c.b16 %v582, %v581
        %v594 = vpack.c.b16 %v584, %v583
        %v595 = vpack.c.b16 %v586, %v585
        %v596 = vpack.c.b16 %v588, %v587
        %605 = vmatprep.subr.bf16.mxu0 0
        %606 = vmatpush1.bf16.msra.mxu0 %v589
        %607 = vmatprep.subr.bf16.mxu0 0
        %608 = vmatpush1.bf16.msra.mxu0 %v590
        %609 = vmatprep.subr.bf16.mxu0 0
        %610 = vmatpush1.bf16.msra.mxu0 %v591
        %611 = vmatprep.subr.bf16.mxu0 0
        %612 = vmatpush1.bf16.msra.mxu0 %v592
        %613 = vmatprep.subr.bf16.mxu0 0
        %614 = vmatpush1.bf16.msra.mxu0 %v593
        %615 = vmatprep.subr.bf16.mxu0 0
        %616 = vmatpush1.bf16.msra.mxu0 %v594
        %617 = vmatprep.subr.bf16.mxu0 0
        %618 = vmatpush1.bf16.msra.mxu0 %v595
        %619 = vmatprep.subr.bf16.mxu0 0
        %620 = vmatpush1.bf16.msra.mxu0 %v596
        %621 = vmatprep.subr.bf16.mxu0 0
        %622 = vmatpush1.bf16.msra.mxu0 0
        %623 = vmatprep.subr.bf16.mxu0 0
        %624 = vmatpush1.bf16.msra.mxu0 0
        %625 = vmatprep.subr.bf16.mxu0 0
        %626 = vmatpush1.bf16.msra.mxu0 0
        %627 = vmatprep.subr.bf16.mxu0 0
        %628 = vmatpush1.bf16.msra.mxu0 0
        %629 = vmatprep.subr.bf16.mxu0 0
        %630 = vmatpush1.bf16.msra.mxu0 0
        %631 = vmatprep.subr.bf16.mxu0 0
        %632 = vmatpush1.bf16.msra.mxu0 0
        %633 = vmatprep.subr.bf16.mxu0 0
        %634 = vmatpush1.bf16.msra.mxu0 0
        %635 = vmatprep.subr.bf16.mxu0 0
        %636 = vmatpush1.bf16.msra.mxu0 0
        %637 = vmatprep.mubr.bf16.mxu0 0
        %638 = vmatmul.mubr.bf16.gmra.mrb[0].mxu0 %v532
        %v639 = vpop.f32.mrb[0].mxu0
        %v640 = vadd.f32 0.0, %v639
        %v641 = vpop.f32.mrb[0].mxu0
        %v642 = vpop.f32.mrb[0].mxu0
        %v643 = vadd.f32 0.0, %v642
        %v644 = vpop.f32.mrb[0].mxu0
        %645 = vmatprep.mubr.bf16.mxu0 0
        %646 = vmatmul.mubr.bf16.gmra.mrb[0].mxu0 %v533
        %v647 = vpop.f32.mrb[0].mxu0
        %v648 = vadd.f32 0.0, %v647
        %v649 = vpop.f32.mrb[0].mxu0
        %v650 = vpop.f32.mrb[0].mxu0
        %v651 = vadd.f32 0.0, %v650
        %v652 = vpop.f32.mrb[0].mxu0
        %653 = vmatprep.mubr.bf16.mxu0 0
        %654 = vmatmul.mubr.bf16.gmra.mrb[0].mxu0 %v534
        %v655 = vpop.f32.mrb[0].mxu0
        %v656 = vadd.f32 0.0, %v655
        %v657 = vpop.f32.mrb[0].mxu0
        %v658 = vpop.f32.mrb[0].mxu0
        %v659 = vadd.f32 0.0, %v658
        %v660 = vpop.f32.mrb[0].mxu0
        %661 = vmatprep.mubr.bf16.mxu0 0
        %662 = vmatmul.mubr.bf16.gmra.mrb[0].mxu0 %v535
        %v663 = vpop.f32.mrb[0].mxu0
        %v664 = vadd.f32 0.0, %v663
        %v665 = vpop.f32.mrb[0].mxu0
        %v666 = vpop.f32.mrb[0].mxu0
        %v667 = vadd.f32 0.0, %v666
        %v668 = vpop.f32.mrb[0].mxu0
        %669 = vmatprep.mubr.bf16.mxu0 0
        %670 = vmatmul.mubr.bf16.gmra.mrb[0].mxu0 %v536
        %v671 = vpop.f32.mrb[0].mxu0
        %v672 = vadd.f32 0.0, %v671
        %v673 = vpop.f32.mrb[0].mxu0
        %v674 = vpop.f32.mrb[0].mxu0
        %v675 = vadd.f32 0.0, %v674
        %v676 = vpop.f32.mrb[0].mxu0
        %677 = vmatprep.mubr.bf16.mxu0 0
        %678 = vmatmul.mubr.bf16.gmra.mrb[0].mxu0 %v537
        %v679 = vpop.f32.mrb[0].mxu0
        %v680 = vadd.f32 0.0, %v679
        %v681 = vpop.f32.mrb[0].mxu0
        %v682 = vpop.f32.mrb[0].mxu0
        %v683 = vadd.f32 0.0, %v682
        %v684 = vpop.f32.mrb[0].mxu0
        %685 = vmatprep.mubr.bf16.mxu0 0
        %686 = vmatmul.mubr.bf16.gmra.mrb[0].mxu0 %v538
        %v687 = vpop.f32.mrb[0].mxu0
        %v688 = vadd.f32 0.0, %v687
        %v689 = vpop.f32.mrb[0].mxu0
        %v690 = vpop.f32.mrb[0].mxu0
        %v691 = vadd.f32 0.0, %v690
        %v692 = vpop.f32.mrb[0].mxu0
        %693 = vmatprep.mubr.bf16.mxu0 0
        %694 = vmatmul.mubr.bf16.gmra.mrb[0].mxu0 %v539
        %v695 = vpop.f32.mrb[0].mxu0
        %v696 = vadd.f32 0.0, %v695
        %v697 = vpop.f32.mrb[0].mxu0
        %v698 = vpop.f32.mrb[0].mxu0
        %v699 = vadd.f32 0.0, %v698
        %v700 = vpop.f32.mrb[0].mxu0
        %701 = vmatprep.mubr.bf16.mxu0 0
        %702 = vmatmul.mubr.bf16.gmra.mrb[0].mxu0 %v540
        %v703 = vpop.f32.mrb[0].mxu0
        %v704 = vadd.f32 0.0, %v703
        %v705 = vpop.f32.mrb[0].mxu0
        %v706 = vpop.f32.mrb[0].mxu0
        %v707 = vadd.f32 0.0, %v706
        %v708 = vpop.f32.mrb[0].mxu0
        %709 = vdwg.mxu0
        %v710 = vadd.f32 %v640, 1.0
        %v711 = vadd.f32 %v643, 1.0
        %v712 = vadd.f32 %v648, 1.0
        %v713 = vadd.f32 %v651, 1.0
        %v714 = vadd.f32 %v656, 1.0
        %v715 = vadd.f32 %v659, 1.0
        %v716 = vadd.f32 %v664, 1.0
        %v717 = vadd.f32 %v667, 1.0
        %v718 = vadd.f32 %v672, 1.0
        %v719 = vadd.f32 %v675, 1.0
        %v720 = vadd.f32 %v680, 1.0
        %v721 = vadd.f32 %v683, 1.0
        %v722 = vadd.f32 %v688, 1.0
        %v723 = vadd.f32 %v691, 1.0
        %v724 = vadd.f32 %v696, 1.0
        %v725 = vadd.f32 %v699, 1.0
        %v726 = vadd.f32 %v704, 1.0
        %v727 = vadd.f32 %v707, 1.0
        %v728 = vrcp.pop %v710
        %v729 = vrcp.pop %v711
        %v730 = vrcp.pop %v712
        %v731 = vrcp.pop %v713
        %v732 = vrcp.pop %v714
        %v733 = vrcp.pop %v715
        %v734 = vrcp.pop %v716
        %v735 = vrcp.pop %v717
        %v736 = vrcp.pop %v718
        %v737 = vrcp.pop %v719
        %v738 = vrcp.pop %v720
        %v739 = vrcp.pop %v721
        %v740 = vrcp.pop %v722
        %v741 = vrcp.pop %v723
        %v742 = vrcp.pop %v724
        %v743 = vrcp.pop %v725
        %v744 = vrcp.pop %v726
        %v745 = vrcp.pop %v727
        %v746 = vmul.f32 %v640, %v728
        %v747 = vmul.f32 %v643, %v729
        %v748 = vmul.f32 %v648, %v730
        %v749 = vmul.f32 %v651, %v731
        %v750 = vmul.f32 %v656, %v732
        %v751 = vmul.f32 %v659, %v733
        %v752 = vmul.f32 %v664, %v734
        %v753 = vmul.f32 %v667, %v735
        %v754 = vmul.f32 %v672, %v736
        %v755 = vmul.f32 %v675, %v737
        %v756 = vmul.f32 %v680, %v738
        %v757 = vmul.f32 %v683, %v739
        %v758 = vmul.f32 %v688, %v740
        %v759 = vmul.f32 %v691, %v741
        %v760 = vmul.f32 %v696, %v742
        %v761 = vmul.f32 %v699, %v743
        %v762 = vmul.f32 %v704, %v744
        %v763 = vmul.f32 %v707, %v745
        %v764 = vadd.f32 %v640, 1e-07
        %v765 = vadd.f32 %v643, 1e-07
        %v766 = vadd.f32 %v648, 1e-07
        %v767 = vadd.f32 %v651, 1e-07
        %v768 = vadd.f32 %v656, 1e-07
        %v769 = vadd.f32 %v659, 1e-07
        %v770 = vadd.f32 %v664, 1e-07
        %v771 = vadd.f32 %v667, 1e-07
        %v772 = vadd.f32 %v672, 1e-07
        %v773 = vadd.f32 %v675, 1e-07
        %v774 = vadd.f32 %v680, 1e-07
        %v775 = vadd.f32 %v683, 1e-07
        %v776 = vadd.f32 %v688, 1e-07
        %v777 = vadd.f32 %v691, 1e-07
        %v778 = vadd.f32 %v696, 1e-07
        %v779 = vadd.f32 %v699, 1e-07
        %v780 = vadd.f32 %v704, 1e-07
        %v781 = vadd.f32 %v707, 1e-07
        %v782 = vrsqrt.pop %v764
        %v783 = vrsqrt.pop %v765
        %v784 = vrsqrt.pop %v766
        %v785 = vrsqrt.pop %v767
        %v786 = vrsqrt.pop %v768
        %v787 = vrsqrt.pop %v769
        %v788 = vrsqrt.pop %v770
        %v789 = vrsqrt.pop %v771
        %v790 = vrsqrt.pop %v772
        %v791 = vrsqrt.pop %v773
        %v792 = vrsqrt.pop %v774
        %v793 = vrsqrt.pop %v775
        %v794 = vrsqrt.pop %v776
        %v795 = vrsqrt.pop %v777
        %v796 = vrsqrt.pop %v778
        %v797 = vrsqrt.pop %v779
        %v798 = vrsqrt.pop %v780
        %v799 = vrsqrt.pop %v781
        %v800 = vmul.f32 %v746, %v782
        %v801 = vmul.f32 %v747, %v783
        %v802 = vmul.f32 %v748, %v784
        %v803 = vmul.f32 %v749, %v785
        %v804 = vmul.f32 %v750, %v786
        %v805 = vmul.f32 %v751, %v787
        %v806 = vmul.f32 %v752, %v788
        %v807 = vmul.f32 %v753, %v789
        %v808 = vmul.f32 %v754, %v790
        %v809 = vmul.f32 %v755, %v791
        %v810 = vmul.f32 %v756, %v792
        %v811 = vmul.f32 %v757, %v793
        %v812 = vmul.f32 %v758, %v794
        %v813 = vmul.f32 %v759, %v795
        %v814 = vmul.f32 %v760, %v796
        %v815 = vmul.f32 %v761, %v797
        %v816 = vmul.f32 %v762, %v798
        %v817 = vmul.f32 %v763, %v799
        %v818 = vmul.f32 %v800, %v496
        %v819 = vmul.f32 %v801, %v497
        %v820 = vmul.f32 %v802, %v498
        %v821 = vmul.f32 %v803, %v499
        %v822 = vmul.f32 %v804, %v500
        %v823 = vmul.f32 %v805, %v501
        %v824 = vmul.f32 %v806, %v502
        %v825 = vmul.f32 %v807, %v503
        %v826 = vmul.f32 %v808, %v504
        %v827 = vmul.f32 %v809, %v505
        %v828 = vmul.f32 %v810, %v506
        %v829 = vmul.f32 %v811, %v507
        %v830 = vmul.f32 %v812, %v508
        %v831 = vmul.f32 %v813, %v509
        %v832 = vmul.f32 %v814, %v510
        %v833 = vmul.f32 %v815, %v511
        %v834 = vmul.f32 %v816, %v512
        %v835 = vmul.f32 %v817, %v513
        %v836 = vpack.c.bf16 %v819, %v818
        %v837 = vpack.c.bf16 %v821, %v820
        %v838 = vpack.c.bf16 %v823, %v822
        %v839 = vpack.c.bf16 %v825, %v824
        %v840 = vpack.c.bf16 %v827, %v826
        %v841 = vpack.c.bf16 %v829, %v828
        %v842 = vpack.c.bf16 %v831, %v830
        %v843 = vpack.c.bf16 %v833, %v832
        %v844 = vpack.c.bf16 %v835, %v834
        %v854 = vunpack.c.l.b16 %v836
        %v855 = vunpack.c.h.b16 %v836
        %v856 = vunpack.c.l.b16 %v837
        %v857 = vunpack.c.h.b16 %v837
        %v858 = vunpack.c.l.b16 %v838
        %v859 = vunpack.c.h.b16 %v838
        %v860 = vunpack.c.l.b16 %v839
        %v861 = vunpack.c.h.b16 %v839
        %v862 = vunpack.c.l.b16 %v840
        %v863 = vunpack.c.h.b16 %v840
        %v864 = vunpack.c.l.b16 %v841
        %v865 = vunpack.c.h.b16 %v841
        %v866 = vunpack.c.l.b16 %v842
        %v867 = vunpack.c.h.b16 %v842
        %v868 = vunpack.c.l.b16 %v843
        %v869 = vunpack.c.h.b16 %v843
        %v870 = vunpack.c.l.b16 %v844
        %v871 = vunpack.c.h.b16 %v844
        %v872 = vpack.c.b16 %v854, %v854
        %v873 = vpack.c.b16 %v855, %v855
        %v874 = vpack.c.b16 %v856, %v856
        %v875 = vpack.c.b16 %v857, %v857
        %v876 = vpack.c.b16 %v858, %v858
        %v877 = vpack.c.b16 %v859, %v859
        %v878 = vpack.c.b16 %v860, %v860
        %v879 = vpack.c.b16 %v861, %v861
        %v880 = vpack.c.b16 %v862, %v862
        %v881 = vpack.c.b16 %v863, %v863
        %v882 = vpack.c.b16 %v864, %v864
        %v883 = vpack.c.b16 %v865, %v865
        %v884 = vpack.c.b16 %v866, %v866
        %v885 = vpack.c.b16 %v867, %v867
        %v886 = vpack.c.b16 %v868, %v868
        %v887 = vpack.c.b16 %v869, %v869
        %v888 = vpack.c.b16 %v870, %v870
        %v889 = vpack.c.b16 %v871, %v871
        %908 = vst [vmem:[%s244] sm:$0xf] %v872
        %909 = vst [vmem:[%s244 + $0x4] sm:$0xf] %v873
        %910 = vst [vmem:[%s244 + $0x8] sm:$0xf] %v874
        %911 = vst [vmem:[%s244 + $0xc] sm:$0xf] %v875
        %912 = vst [vmem:[%s244 + $0x10] sm:$0xf] %v876
        %913 = vst [vmem:[%s244 + $0x14] sm:$0xf] %v877
        %914 = vst [vmem:[%s244 + $0x18] sm:$0xf] %v878
        %915 = vst [vmem:[%s244 + $0x1c] sm:$0xf] %v879
        %916 = vst [vmem:[%s244 + $0x20] sm:$0xf] %v880
        %917 = vst [vmem:[%s244 + $0x24] sm:$0xf] %v881
        %918 = vst [vmem:[%s244 + $0x28] sm:$0xf] %v882
        %919 = vst [vmem:[%s244 + $0x2c] sm:$0xf] %v883
        %920 = vst [vmem:[%s244 + $0x30] sm:$0xf] %v884
        %921 = vst [vmem:[%s244 + $0x34] sm:$0xf] %v885
        %922 = vst [vmem:[%s244 + $0x38] sm:$0xf] %v886
        %923 = vst [vmem:[%s244 + $0x3c] sm:$0xf] %v887
        %924 = vst [vmem:[%s244 + $0x40] sm:$0xf] %v888
        %925 = vst [vmem:[%s244 + $0x44] sm:$0xf] %v889
        %s926 = sand.u32 %s119, 1
        %s927 = scalar_lea.sflag [#allocation4], %s926
        %s928 = sand.u32 %s119, 1
        %s929 = smul.addr %s928, 72
        %s930 = scalar_lea.vmem [#allocation8], %s929
        // Predicated region
        $region49: #{tpu_custom_call.1} parent=35 // pred_check
          %p931 = pneg %p129
        $region50: #{tpu_custom_call.1} parent=35 // pred_check_branch
          %933 = sbr.rel (%p931) target = $region52
        $region51: #{tpu_custom_call.1} parent=35 // pred_region
          %s934 = smul.u32 18, %s22
          %s936 = ssub.s32 1152, 1152
          %937 = vsyncadd %s927, %s936
          %s938 = smul.addr %s934, 64
          %s939 = scalar_lea.hbm %s4, %s938
          %s940 = sshll.u32 %s930, 4
          %s941 = int_to_ptr.vmem [resolvable:$true] %s940
          %946 = dma.vmem_to_hbm [thread:$0]  %s941, 1152, %s939, %s927, 64, 64, 4
        $region52: #{tpu_custom_call.1} parent=35 // pred_fallthru
          _
      $region36: #{tpu_custom_call.1} parent=5 // pred_fallthru
        _
      %p947 = scmp.le.s32.totalorder 2, %s17
      // Predicated region
      $region53: #{tpu_custom_call.1} parent=5 // pred_check
        %p948 = pneg %p947
      $region54: #{tpu_custom_call.1} parent=5 // pred_check_branch
        %950 = sbr.rel (%p948) target = $region56
      $region55: #{tpu_custom_call.1} parent=5 // pred_region
        %s951 = ssub.s32 %s17, 2
        // Predicated region
        $region57: #{tpu_custom_call.1} parent=55 // pred_check
          %p952 = pneg %p135
        $region58: #{tpu_custom_call.1} parent=55 // pred_check_branch
          %954 = sbr.rel (%p952) target = $region60
        $region59: #{tpu_custom_call.1} parent=55 // pred_region
          %s955 = sand.u32 %s120, 1
          %s956 = scalar_lea.sflag [#allocation4], %s955
          %s957 = sand.u32 %s120, 1
          %s958 = smul.addr %s957, 72
          %s959 = scalar_lea.vmem [#allocation8], %s958
          %960 = dma.done %s956, 1152
        $region60: #{tpu_custom_call.1} parent=55 // pred_fallthru
          _
      $region56: #{tpu_custom_call.1} parent=5 // pred_fallthru
        _
    $region6: #{tpu_custom_call.1} parent=1 // loop_footer
      %s21 = sadd.s32 1, %s17
    $region7: #{tpu_custom_call.1} parent=1 // loop_footer_branch
      %16 = sbr.rel target = $region3
    $region8: #{tpu_custom_call.1} parent=1 // loop_exit
      _
    %961 = vsyncpa [#allocation3], 1
    %s962 = scalar_lea.sflag [#allocation3], 1
    %963 = vsyncpa %s962, 1
    %964 = vsyncpa [#allocation6], 1
    %965 = vsyncpa [#allocation4], 1
    %s966 = scalar_lea.sflag [#allocation4], 1
    %967 = vsyncpa %s966, 1

</llo_original>
